<compile_context>
chip_gen: v7x
topology: tpu7x:2x2x1
jax: 0.10.0
libtpu: 0.0.40
codegen_flags: <defaults>
</compile_context>

<pallas_src>
import functools
import math

import jax
import jax.numpy as jnp
from jax import lax
from jax.experimental import pallas as pl
from jax.experimental.pallas import tpu as pltpu

N_EMBD = 128
BLOCK_SIZE = 64                    # max sequence length (causal tril buffer)
NUM_HEADS = 4
HEAD_SIZE = N_EMBD // NUM_HEADS    # 32
DROPOUT_P = 0.15                   # eval mode => identity


def _mha_kernel(x_ref, wqkv_ref, wo_ref, bo_ref, o_ref, qkv_ref, attn_ref,
                *, num_heads, head_size, seq_len):
    rows, _ = x_ref.shape                  # rows = tb * T  (lane-dense 2-D tile)
    T = seq_len
    tb = rows // T
    hdim = num_heads * head_size
    cdt = qkv_ref.dtype                    # MXU operand (compute) dtype

    # ---- 1. Fused QKV projection: one (rows,128)@(128,384) MXU pass. --------
    qkv_ref[...] = jnp.dot(x_ref[...], wqkv_ref[...],
                           preferred_element_type=jnp.float32).astype(cdt)

    # Causal mask shared across sequences/heads -- equivalent to tril[:T, :T].
    row_id = lax.broadcasted_iota(jnp.int32, (T, T), 0)
    col_id = lax.broadcasted_iota(jnp.int32, (T, T), 1)
    causal = col_id <= row_id
    scale = head_size ** -0.5

    # ---- 2. Per-sequence causal attention (fori_loop over sequences). -------
    def batch_body(b, carry):
        r0 = b * T
        if T % 8 == 0:
            r0 = pl.multiple_of(r0, 8)     # sublane-aligned dynamic slice

        q_b = qkv_ref[pl.ds(r0, T), pl.ds(0, hdim)]           # (T, 128)
        k_b = qkv_ref[pl.ds(r0, T), pl.ds(hdim, hdim)]        # (T, 128)
        v_b = qkv_ref[pl.ds(r0, T), pl.ds(2 * hdim, hdim)]    # (T, 128)
        k_t = k_b.T                        # ONE XLU transpose per sequence

        outs = []
        for h in range(num_heads):         # 4 heads -> keep unrolled
            lo = h * head_size
            q_h = q_b[:, lo:lo + head_size]            # (T, 32)
            k_th = k_t[lo:lo + head_size, :]           # (32, T) sublane slice
            v_h = v_b[:, lo:lo + head_size]            # (T, 32)

            wei = jnp.dot(q_h, k_th,
                          preferred_element_type=jnp.float32) * scale  # (T, T)
            wei = jnp.where(causal, wei, -jnp.inf)
            wei = jnp.exp(wei - jnp.max(wei, axis=-1, keepdims=True))
            wei = wei * pl.reciprocal(jnp.sum(wei, axis=-1, keepdims=True),
                                      approx=True)
            # TODO(synk): training-mode dropout(p=0.15) on `wei` would go here.
            outs.append(jnp.dot(wei.astype(cdt), v_h,
                                preferred_element_type=jnp.float32))    # (T, 32)

        # concat_h(out_h) along lanes -> (T, 128) slab of the tile buffer.
        attn_ref[pl.ds(r0, T), :] = jnp.concatenate(outs, axis=-1).astype(cdt)
        return carry

    lax.fori_loop(0, tb, batch_body, 0)

    # ---- 3. Output projection for the WHOLE tile: one K=128 matmul. ---------
    y = jnp.dot(attn_ref[...], wo_ref[...], preferred_element_type=jnp.float32)
    y = y + bo_ref[...].astype(jnp.float32)    # bias broadcast hoisted, added once
    # TODO(synk): training-mode dropout(p=0.15) on the projected output.
    o_ref[...] = y.astype(o_ref.dtype)


def _cores_per_chip():
    """v7x exposes 2 TensorCores per chip; v5e/v6e have 1."""
    try:
        kind = (jax.devices()[0].device_kind or "").lower()
    except Exception:
        return 1
    return 2 if ("v7" in kind or "7x" in kind) else 1


def _pick_batch_tile(B, T, n_cores, itemsize):
    """Largest sensible batch tile: per-step VMEM footprint is only a few MiB,
    so grow the tile on single-TC chips; on v7x keep >= n_cores grid steps."""
    rows_target = 1024
    tb = max(1, rows_target // max(T, 1))
    # VMEM guard: x + qkv + attn + out (+ double buffering), budget ~24 MiB.
    bytes_per_seq = T * N_EMBD * (8 * itemsize + 12)
    tb = min(tb, max(1, (24 << 20) // max(bytes_per_seq, 1)))
    if n_cores > 1:
        tb = min(tb, pl.cdiv(B, n_cores))      # give every TensorCore a step
    tb = max(1, min(tb, B))
    # Keep rows = tb*T a multiple of 8 so the (rows, 128) block is tileable.
    mult = 8 // math.gcd(T, 8)
    return ((tb + mult - 1) // mult) * mult


def multihead_attention_pallas(x, wq, wk, wv, wo, bo, *,
                               num_heads=NUM_HEADS, head_size=HEAD_SIZE,
                               compute_dtype=jnp.bfloat16, batch_tile=None):
    """x: (B, T, n_embd) -> (B, T, n_embd).

    Weights are stored transposed relative to torch (y = x @ W):
      wq/wk/wv: (n_embd, num_heads*head_size), wo: (num_heads*head_size, n_embd).
    MXU operands run in `compute_dtype` (default bf16) with f32 accumulation and
    f32 softmax; pass compute_dtype=jnp.float32 for exact-dtype math.
    """
    B, T, D = x.shape
    assert D == N_EMBD
    assert T <= BLOCK_SIZE
    hdim = num_heads * head_size
    assert wq.shape == (D, hdim) and wk.shape == (D, hdim) and wv.shape == (D, hdim)
    assert wo.shape == (hdim, D) and bo.shape == (D,)

    out_dtype = x.dtype
    n_cores = _cores_per_chip()
    itemsize = jnp.dtype(compute_dtype).itemsize
    tb = batch_tile if batch_tile is not None else _pick_batch_tile(B, T, n_cores, itemsize)

    num_steps = pl.cdiv(B, tb)
    if n_cores > 1:
        # Even step count so no v7x TensorCore idles on a tail step.
        num_steps = pl.cdiv(num_steps, n_cores) * n_cores
    Bp = num_steps * tb

    # Fused QKV weight: one (128, 384) matmul instead of three (128, 128) ones.
    wqkv = jnp.concatenate([wq, wk, wv], axis=1).astype(compute_dtype)
    wo_c = wo.astype(compute_dtype)
    bo2 = bo.reshape(1, D)

    xp = x.astype(compute_dtype)
    if Bp != B:
        xp = jnp.pad(xp, ((0, Bp - B), (0, 0), (0, 0)))   # zero seqs: harmless
    x2 = xp.reshape(Bp * T, D)        # lane-dense 2-D slab; no in-kernel reshapes

    rows = tb * T
    kernel = functools.partial(_mha_kernel, num_heads=num_heads,
                               head_size=head_size, seq_len=T)

    out = pl.pallas_call(
        kernel,
        out_shape=jax.ShapeDtypeStruct((Bp * T, D), out_dtype),
        grid_spec=pltpu.PrefetchScalarGridSpec(
            num_scalar_prefetch=0,
            grid=(num_steps,),
            in_specs=[
                pl.BlockSpec((rows, D), lambda i: (i, 0)),        # x tile
                pl.BlockSpec((D, 3 * hdim), lambda i: (0, 0)),    # Wqkv (resident)
                pl.BlockSpec((hdim, D), lambda i: (0, 0)),        # Wo (resident)
                pl.BlockSpec((1, D), lambda i: (0, 0)),           # proj bias
            ],
            out_specs=pl.BlockSpec((rows, D), lambda i: (i, 0)),
            scratch_shapes=[
                pltpu.VMEM((rows, 3 * hdim), compute_dtype),      # fused q|k|v
                pltpu.VMEM((rows, hdim), compute_dtype),          # concat head outs
            ],
        ),
        compiler_params=pltpu.CompilerParams(
            dimension_semantics=("parallel",),
        ),
    )(x2, wqkv, wo_c, bo2)

    return out.reshape(Bp, T, D)[:B]


def _init_params(key, num_heads=NUM_HEADS, head_size=HEAD_SIZE, dtype=jnp.float32):
    """nn.Linear-style U(-1/sqrt(fan_in), +1/sqrt(fan_in)) init."""
    kq, kk, kv, kwo, kbo = jax.random.split(key, 5)
    hdim = num_heads * head_size
    b_in = 1.0 / (N_EMBD ** 0.5)
    b_proj = 1.0 / (hdim ** 0.5)
    wq = jax.random.uniform(kq, (N_EMBD, hdim), dtype, -b_in, b_in)
    wk = jax.random.uniform(kk, (N_EMBD, hdim), dtype, -b_in, b_in)
    wv = jax.random.uniform(kv, (N_EMBD, hdim), dtype, -b_in, b_in)
    wo = jax.random.uniform(kwo, (hdim, N_EMBD), dtype, -b_proj, b_proj)
    bo = jax.random.uniform(kbo, (N_EMBD,), dtype, -b_proj, b_proj)
    return wq, wk, wv, wo, bo


def _reference(x, wq, wk, wv, wo, bo, num_heads=NUM_HEADS, head_size=HEAD_SIZE):
    """Pure-JAX f32 mirror of the PyTorch MultiHeadAttention forward (eval mode)."""
    B, T, D = x.shape
    q = x @ wq
    k = x @ wk
    v = x @ wv
    mask = jnp.tril(jnp.ones((T, T), bool))
    outs = []
    for h in range(num_heads):
        sl = slice(h * head_size, (h + 1) * head_size)
        qh, kh, vh = q[..., sl], k[..., sl], v[..., sl]
        wei = jnp.einsum('btd,bsd->bts', qh, kh) * head_size ** -0.5
        wei = jnp.where(mask, wei, -jnp.inf)
        wei = jax.nn.softmax(wei, axis=-1)
        outs.append(jnp.einsum('bts,bsd->btd', wei, vh))
    out = jnp.concatenate(outs, axis=-1)
    return out @ wo + bo


if __name__ == "__main__":
    key = jax.random.PRNGKey(0)
    kx, kp = jax.random.split(key)

    B, T = 2, 8   # small: 2 sequences x 8 tokens, n_embd=128, 4 heads of size 32
    x = jax.random.normal(kx, (B, T, N_EMBD), jnp.float32)
    wq, wk, wv, wo, bo = _init_params(kp)

    y_ref = _reference(x, wq, wk, wv, wo, bo)

    # Exact-dtype path (f32 MXU operands): tight tolerance.
    y32 = multihead_attention_pallas(x, wq, wk, wv, wo, bo,
                                     compute_dtype=jnp.float32)
    y32 = jax.block_until_ready(y32)
    assert y32.shape == (B, T, N_EMBD)
    assert jnp.allclose(y32, y_ref, atol=1e-2, rtol=1e-2), "f32 path mismatch"

    # Default bf16-MXU path (f32 accumulation + f32 softmax): bf16 tolerance.
    ybf = multihead_attention_pallas(x, wq, wk, wv, wo, bo)
    ybf = jax.block_until_ready(ybf)
    assert ybf.shape == (B, T, N_EMBD)
    assert jnp.allclose(ybf, y_ref, atol=6e-2, rtol=6e-2), "bf16 path mismatch"

    print("KERNEL_OK")
</pallas_src>

<mosaic_0001>
module attributes {stable_mosaic.version = 11 : i64} {
  func.func @_mha_kernel(%arg0: i32, %arg1: memref<16x128xf32, #tpu.memory_space<vmem>>, %arg2: memref<128x384xf32, #tpu.memory_space<vmem>>, %arg3: memref<128x128xf32, #tpu.memory_space<vmem>>, %arg4: memref<1x128xf32, #tpu.memory_space<vmem>>, %arg5: memref<16x128xf32, #tpu.memory_space<vmem>>, %arg6: memref<16x384xf32, #tpu.memory_space<vmem>>, %arg7: memref<16x128xf32, #tpu.memory_space<vmem>>) attributes {dimension_semantics = [#tpu.dimension_semantics<parallel>], iteration_bounds = array<i64: 1>, scalar_prefetch = 0 : i64, scratch_operands = 2 : i64, tpu.core_type = #tpu.core_type<tc>, window_params = [{transform_indices = @transform_0, window_bounds = array<i64: 16, 128>}, {pipeline_mode = #tpu.pipeline_mode<synchronous>, transform_indices = @transform_1, window_bounds = array<i64: 128, 384>}, {pipeline_mode = #tpu.pipeline_mode<synchronous>, transform_indices = @transform_2, window_bounds = array<i64: 128, 128>}, {pipeline_mode = #tpu.pipeline_mode<synchronous>, transform_indices = @transform_3, window_bounds = array<i64: 1, 128>}, {transform_indices = @transform_4, window_bounds = array<i64: 16, 128>}]} {
    %c0 = arith.constant 0 : index
    %c0_0 = arith.constant 0 : index
    %0 = vector.load %arg1[%c0, %c0_0] : memref<16x128xf32, #tpu.memory_space<vmem>>, vector<16x128xf32>
    %c0_1 = arith.constant 0 : index
    %c0_2 = arith.constant 0 : index
    %1 = vector.load %arg2[%c0_1, %c0_2] : memref<128x384xf32, #tpu.memory_space<vmem>>, vector<128x384xf32>
    %cst = arith.constant dense<0.000000e+00> : vector<16x384xf32>
    %2 = tpu.matmul %0, %1, %cst {dimension_numbers = #tpu.dot_dimension_numbers<[1], [0], [0], [1], [0, 0, 1, 1], [], []>} : vector<16x128xf32>, vector<128x384xf32>, vector<16x384xf32> -> vector<16x384xf32>
    %c0_3 = arith.constant 0 : index
    %c0_4 = arith.constant 0 : index
    %3 = vector.load %arg6[%c0_3, %c0_4] : memref<16x384xf32, #tpu.memory_space<vmem>>, vector<16x384xf32>
    tpu.vector_store %arg6[%c0_3, %c0_4], %2 {strides = array<i32>} : memref<16x384xf32, #tpu.memory_space<vmem>>, vector<16x384xf32>,
    %4 = tpu.iota {dimensions = array<i32: 0>} : vector<8x8xi32>
    %5 = tpu.iota {dimensions = array<i32: 1>} : vector<8x8xi32>
    %6 = arith.cmpi sle, %5, %4 : vector<8x8xi32>
    %c0_i32 = arith.constant 0 : i32
    %c2_i32 = arith.constant 2 : i32
    %7 = arith.addi %c0_i32, %c2_i32 : i32
    %c1_i32 = arith.constant 1 : i32
    scf.for %arg8 = %c0_i32 to %7 step %c1_i32  : i32 {
      %c8_i32 = arith.constant 8 : i32
      %15 = arith.muli %arg8, %c8_i32 : i32
      %16 = tpu.assume_multiple %15, 8 : i32
      %17 = arith.index_cast %16 : i32 to index
      %c0_15 = arith.constant 0 : index
      %18 = vector.load %arg6[%17, %c0_15] : memref<16x384xf32, #tpu.memory_space<vmem>>, vector<8x128xf32>
      %19 = arith.index_cast %16 : i32 to index
      %c128 = arith.constant 128 : index
      %20 = vector.load %arg6[%19, %c128] : memref<16x384xf32, #tpu.memory_space<vmem>>, vector<8x128xf32>
      %21 = arith.index_cast %16 : i32 to index
      %c256 = arith.constant 256 : index
      %22 = vector.load %arg6[%21, %c256] : memref<16x384xf32, #tpu.memory_space<vmem>>, vector<8x128xf32>
      %23 = tpu.transpose %20, [1, 0] : vector<8x128xf32> -> vector<128x8xf32>
      %24 = vector.extract_strided_slice %18 {offsets = [0, 0], sizes = [8, 32], strides = [1, 1]} : vector<8x128xf32> to vector<8x32xf32>
      %25 = vector.extract_strided_slice %23 {offsets = [0, 0], sizes = [32, 8], strides = [1, 1]} : vector<128x8xf32> to vector<32x8xf32>
      %26 = vector.extract_strided_slice %22 {offsets = [0, 0], sizes = [8, 32], strides = [1, 1]} : vector<8x128xf32> to vector<8x32xf32>
      %cst_16 = arith.constant dense<0.000000e+00> : vector<8x8xf32>
      %27 = tpu.matmul %24, %25, %cst_16 {dimension_numbers = #tpu.dot_dimension_numbers<[1], [0], [0], [1], [0, 0, 1, 1], [], []>} : vector<8x32xf32>, vector<32x8xf32>, vector<8x8xf32> -> vector<8x8xf32>
      %cst_17 = arith.constant 0.176776692 : f32
      %28 = vector.broadcast %cst_17 : f32 to vector<8x8xf32>
      %29 = arith.mulf %27, %28 : vector<8x8xf32>
      %cst_18 = arith.constant 0xFF800000 : f32
      %30 = vector.broadcast %cst_18 : f32 to vector<8x8xf32>
      %31 = arith.select %6, %29, %30 : vector<8x8xi1>, vector<8x8xf32>
      %cst_19 = arith.constant dense<0xFF800000> : vector<8xf32>
      %32 = vector.multi_reduction <maximumf>, %31, %cst_19 [1] : vector<8x8xf32> to vector<8xf32>
      %33 = vector.shape_cast %32 : vector<8xf32> to vector<8x1xf32>
      %34 = vector.broadcast %33 : vector<8x1xf32> to vector<8x8xf32>
      %35 = arith.subf %31, %34 : vector<8x8xf32>
      %36 = math.exp %35 : vector<8x8xf32>
      %cst_20 = arith.constant dense<0.000000e+00> : vector<8xf32>
      %37 = vector.multi_reduction <add>, %36, %cst_20 [1] : vector<8x8xf32> to vector<8xf32>
      %38 = vector.shape_cast %37 : vector<8xf32> to vector<8x1xf32>
      %39 = tpu.reciprocal %38 {approx = true} : vector<8x1xf32> -> vector<8x1xf32>
      %40 = vector.broadcast %39 : vector<8x1xf32> to vector<8x8xf32>
      %41 = arith.mulf %36, %40 : vector<8x8xf32>
      %cst_21 = arith.constant dense<0.000000e+00> : vector<8x32xf32>
      %42 = tpu.matmul %41, %26, %cst_21 {dimension_numbers = #tpu.dot_dimension_numbers<[1], [0], [0], [1], [0, 0, 1, 1], [], []>} : vector<8x8xf32>, vector<8x32xf32>, vector<8x32xf32> -> vector<8x32xf32>
      %43 = vector.extract_strided_slice %18 {offsets = [0, 32], sizes = [8, 32], strides = [1, 1]} : vector<8x128xf32> to vector<8x32xf32>
      %44 = vector.extract_strided_slice %23 {offsets = [32, 0], sizes = [32, 8], strides = [1, 1]} : vector<128x8xf32> to vector<32x8xf32>
      %45 = vector.extract_strided_slice %22 {offsets = [0, 32], sizes = [8, 32], strides = [1, 1]} : vector<8x128xf32> to vector<8x32xf32>
      %cst_22 = arith.constant dense<0.000000e+00> : vector<8x8xf32>
      %46 = tpu.matmul %43, %44, %cst_22 {dimension_numbers = #tpu.dot_dimension_numbers<[1], [0], [0], [1], [0, 0, 1, 1], [], []>} : vector<8x32xf32>, vector<32x8xf32>, vector<8x8xf32> -> vector<8x8xf32>
      %cst_23 = arith.constant 0.176776692 : f32
      %47 = vector.broadcast %cst_23 : f32 to vector<8x8xf32>
      %48 = arith.mulf %46, %47 : vector<8x8xf32>
      %cst_24 = arith.constant 0xFF800000 : f32
      %49 = vector.broadcast %cst_24 : f32 to vector<8x8xf32>
      %50 = arith.select %6, %48, %49 : vector<8x8xi1>, vector<8x8xf32>
      %cst_25 = arith.constant dense<0xFF800000> : vector<8xf32>
      %51 = vector.multi_reduction <maximumf>, %50, %cst_25 [1] : vector<8x8xf32> to vector<8xf32>
      %52 = vector.shape_cast %51 : vector<8xf32> to vector<8x1xf32>
      %53 = vector.broadcast %52 : vector<8x1xf32> to vector<8x8xf32>
      %54 = arith.subf %50, %53 : vector<8x8xf32>
      %55 = math.exp %54 : vector<8x8xf32>
      %cst_26 = arith.constant dense<0.000000e+00> : vector<8xf32>
      %56 = vector.multi_reduction <add>, %55, %cst_26 [1] : vector<8x8xf32> to vector<8xf32>
      %57 = vector.shape_cast %56 : vector<8xf32> to vector<8x1xf32>
      %58 = tpu.reciprocal %57 {approx = true} : vector<8x1xf32> -> vector<8x1xf32>
      %59 = vector.broadcast %58 : vector<8x1xf32> to vector<8x8xf32>
      %60 = arith.mulf %55, %59 : vector<8x8xf32>
      %cst_27 = arith.constant dense<0.000000e+00> : vector<8x32xf32>
      %61 = tpu.matmul %60, %45, %cst_27 {dimension_numbers = #tpu.dot_dimension_numbers<[1], [0], [0], [1], [0, 0, 1, 1], [], []>} : vector<8x8xf32>, vector<8x32xf32>, vector<8x32xf32> -> vector<8x32xf32>
      %62 = vector.extract_strided_slice %18 {offsets = [0, 64], sizes = [8, 32], strides = [1, 1]} : vector<8x128xf32> to vector<8x32xf32>
      %63 = vector.extract_strided_slice %23 {offsets = [64, 0], sizes = [32, 8], strides = [1, 1]} : vector<128x8xf32> to vector<32x8xf32>
      %64 = vector.extract_strided_slice %22 {offsets = [0, 64], sizes = [8, 32], strides = [1, 1]} : vector<8x128xf32> to vector<8x32xf32>
      %cst_28 = arith.constant dense<0.000000e+00> : vector<8x8xf32>
      %65 = tpu.matmul %62, %63, %cst_28 {dimension_numbers = #tpu.dot_dimension_numbers<[1], [0], [0], [1], [0, 0, 1, 1], [], []>} : vector<8x32xf32>, vector<32x8xf32>, vector<8x8xf32> -> vector<8x8xf32>
      %cst_29 = arith.constant 0.176776692 : f32
      %66 = vector.broadcast %cst_29 : f32 to vector<8x8xf32>
      %67 = arith.mulf %65, %66 : vector<8x8xf32>
      %cst_30 = arith.constant 0xFF800000 : f32
      %68 = vector.broadcast %cst_30 : f32 to vector<8x8xf32>
      %69 = arith.select %6, %67, %68 : vector<8x8xi1>, vector<8x8xf32>
      %cst_31 = arith.constant dense<0xFF800000> : vector<8xf32>
      %70 = vector.multi_reduction <maximumf>, %69, %cst_31 [1] : vector<8x8xf32> to vector<8xf32>
      %71 = vector.shape_cast %70 : vector<8xf32> to vector<8x1xf32>
      %72 = vector.broadcast %71 : vector<8x1xf32> to vector<8x8xf32>
      %73 = arith.subf %69, %72 : vector<8x8xf32>
      %74 = math.exp %73 : vector<8x8xf32>
      %cst_32 = arith.constant dense<0.000000e+00> : vector<8xf32>
      %75 = vector.multi_reduction <add>, %74, %cst_32 [1] : vector<8x8xf32> to vector<8xf32>
      %76 = vector.shape_cast %75 : vector<8xf32> to vector<8x1xf32>
      %77 = tpu.reciprocal %76 {approx = true} : vector<8x1xf32> -> vector<8x1xf32>
      %78 = vector.broadcast %77 : vector<8x1xf32> to vector<8x8xf32>
      %79 = arith.mulf %74, %78 : vector<8x8xf32>
      %cst_33 = arith.constant dense<0.000000e+00> : vector<8x32xf32>
      %80 = tpu.matmul %79, %64, %cst_33 {dimension_numbers = #tpu.dot_dimension_numbers<[1], [0], [0], [1], [0, 0, 1, 1], [], []>} : vector<8x8xf32>, vector<8x32xf32>, vector<8x32xf32> -> vector<8x32xf32>
      %81 = vector.extract_strided_slice %18 {offsets = [0, 96], sizes = [8, 32], strides = [1, 1]} : vector<8x128xf32> to vector<8x32xf32>
      %82 = vector.extract_strided_slice %23 {offsets = [96, 0], sizes = [32, 8], strides = [1, 1]} : vector<128x8xf32> to vector<32x8xf32>
      %83 = vector.extract_strided_slice %22 {offsets = [0, 96], sizes = [8, 32], strides = [1, 1]} : vector<8x128xf32> to vector<8x32xf32>
      %cst_34 = arith.constant dense<0.000000e+00> : vector<8x8xf32>
      %84 = tpu.matmul %81, %82, %cst_34 {dimension_numbers = #tpu.dot_dimension_numbers<[1], [0], [0], [1], [0, 0, 1, 1], [], []>} : vector<8x32xf32>, vector<32x8xf32>, vector<8x8xf32> -> vector<8x8xf32>
      %cst_35 = arith.constant 0.176776692 : f32
      %85 = vector.broadcast %cst_35 : f32 to vector<8x8xf32>
      %86 = arith.mulf %84, %85 : vector<8x8xf32>
      %cst_36 = arith.constant 0xFF800000 : f32
      %87 = vector.broadcast %cst_36 : f32 to vector<8x8xf32>
      %88 = arith.select %6, %86, %87 : vector<8x8xi1>, vector<8x8xf32>
      %cst_37 = arith.constant dense<0xFF800000> : vector<8xf32>
      %89 = vector.multi_reduction <maximumf>, %88, %cst_37 [1] : vector<8x8xf32> to vector<8xf32>
      %90 = vector.shape_cast %89 : vector<8xf32> to vector<8x1xf32>
      %91 = vector.broadcast %90 : vector<8x1xf32> to vector<8x8xf32>
      %92 = arith.subf %88, %91 : vector<8x8xf32>
      %93 = math.exp %92 : vector<8x8xf32>
      %cst_38 = arith.constant dense<0.000000e+00> : vector<8xf32>
      %94 = vector.multi_reduction <add>, %93, %cst_38 [1] : vector<8x8xf32> to vector<8xf32>
      %95 = vector.shape_cast %94 : vector<8xf32> to vector<8x1xf32>
      %96 = tpu.reciprocal %95 {approx = true} : vector<8x1xf32> -> vector<8x1xf32>
      %97 = vector.broadcast %96 : vector<8x1xf32> to vector<8x8xf32>
      %98 = arith.mulf %93, %97 : vector<8x8xf32>
      %cst_39 = arith.constant dense<0.000000e+00> : vector<8x32xf32>
      %99 = tpu.matmul %98, %83, %cst_39 {dimension_numbers = #tpu.dot_dimension_numbers<[1], [0], [0], [1], [0, 0, 1, 1], [], []>} : vector<8x8xf32>, vector<8x32xf32>, vector<8x32xf32> -> vector<8x32xf32>
      %100 = tpu.concatenate %42, %61, %80, %99 in 1 : vector<8x32xf32>, vector<8x32xf32>, vector<8x32xf32>, vector<8x32xf32> -> vector<8x128xf32>
      %101 = arith.index_cast %16 : i32 to index
      %c0_40 = arith.constant 0 : index
      %102 = vector.load %arg7[%101, %c0_40] : memref<16x128xf32, #tpu.memory_space<vmem>>, vector<8x128xf32>
      tpu.vector_store %arg7[%101, %c0_40], %100 {strides = array<i32>} : memref<16x128xf32, #tpu.memory_space<vmem>>, vector<8x128xf32>,
    }
    %c2_i32_5 = arith.constant 2 : i32
    %c0_6 = arith.constant 0 : index
    %c0_7 = arith.constant 0 : index
    %8 = vector.load %arg7[%c0_6, %c0_7] : memref<16x128xf32, #tpu.memory_space<vmem>>, vector<16x128xf32>
    %c0_8 = arith.constant 0 : index
    %c0_9 = arith.constant 0 : index
    %9 = vector.load %arg3[%c0_8, %c0_9] : memref<128x128xf32, #tpu.memory_space<vmem>>, vector<128x128xf32>
    %cst_10 = arith.constant dense<0.000000e+00> : vector<16x128xf32>
    %10 = tpu.matmul %8, %9, %cst_10 {dimension_numbers = #tpu.dot_dimension_numbers<[1], [0], [0], [1], [0, 0, 1, 1], [], []>} : vector<16x128xf32>, vector<128x128xf32>, vector<16x128xf32> -> vector<16x128xf32>
    %c0_11 = arith.constant 0 : index
    %c0_12 = arith.constant 0 : index
    %11 = vector.load %arg4[%c0_11, %c0_12] : memref<1x128xf32, #tpu.memory_space<vmem>>, vector<1x128xf32>
    %12 = vector.broadcast %11 : vector<1x128xf32> to vector<16x128xf32>
    %13 = arith.addf %10, %12 : vector<16x128xf32>
    %c0_13 = arith.constant 0 : index
    %c0_14 = arith.constant 0 : index
    %14 = vector.load %arg5[%c0_13, %c0_14] : memref<16x128xf32, #tpu.memory_space<vmem>>, vector<16x128xf32>
    tpu.vector_store %arg5[%c0_13, %c0_14], %13 {strides = array<i32>} : memref<16x128xf32, #tpu.memory_space<vmem>>, vector<16x128xf32>,
    return
  }
  func.func @transform_0(%arg0: i32) -> (i32, i32) {
    %c0_i32 = arith.constant 0 : i32
    %c0_i32_0 = arith.constant 0 : i32
    return %arg0, %c0_i32 : i32, i32
  }
  func.func @transform_1(%arg0: i32) -> (i32, i32) {
    %c0_i32 = arith.constant 0 : i32
    %c0_i32_0 = arith.constant 0 : i32
    %c0_i32_1 = arith.constant 0 : i32
    return %c0_i32, %c0_i32_0 : i32, i32
  }
  func.func @transform_2(%arg0: i32) -> (i32, i32) {
    %c0_i32 = arith.constant 0 : i32
    %c0_i32_0 = arith.constant 0 : i32
    %c0_i32_1 = arith.constant 0 : i32
    return %c0_i32, %c0_i32_0 : i32, i32
  }
  func.func @transform_3(%arg0: i32) -> (i32, i32) {
    %c0_i32 = arith.constant 0 : i32
    %c0_i32_0 = arith.constant 0 : i32
    %c0_i32_1 = arith.constant 0 : i32
    return %c0_i32, %c0_i32_0 : i32, i32
  }
  func.func @transform_4(%arg0: i32) -> (i32, i32) {
    %c0_i32 = arith.constant 0 : i32
    %c0_i32_0 = arith.constant 0 : i32
    return %arg0, %c0_i32 : i32, i32
  }
}

</mosaic_0001>

<llo_original>
// kernel: tpu_custom_call.1
$region0: #{tpu_custom_call.1}
  #allocation0 [shape = 'u32[]', space=smem, size = 0x4, offset = 0x4, fixed_abs, tag = 'smem constant byte address 0x4 - core index']
  #allocation1 [shape = 'u32[144,128]{1,0:T(1,128)}', space=vmem, size = 0x12000, scoped, tag = 'internal scratch']
  #allocation2 [shape = 'f32[16,384]{1,0:T(8,128)}', space=vmem, size = 0x6000, scoped, tag = 'scratch operand']
  #allocation3 [shape = 'f32[16,128]{1,0:T(8,128)}', space=vmem, size = 0x2000, scoped, tag = 'scratch operand']
  %s0 = inlined_call_operand.hbm [shape: f32[16,128], index: 0, kind: input, shape index: {}]
  %s1 = inlined_call_operand.hbm [shape: f32[128,384], index: 1, kind: input, shape index: {}]
  %s2 = inlined_call_operand.hbm [shape: f32[128,128], index: 2, kind: input, shape index: {}]
  %s3 = inlined_call_operand.vmem [shape: f32[1,128], index: 3, kind: input, shape index: {}]
  %s4 = inlined_call_operand.hbm [shape: f32[16,128], index: 4, kind: output, shape index: {}]
  %s5 = sld [smem:[#allocation0]]
  $region45: #{tpu_custom_call.1} parent=0
    _
  %s7 = ssub.s32 1, %s5
  %s8 = scalar_select 0, %s7, %s5
  $region1: #{tpu_custom_call.1} parent=0
    #allocation4 [shape = 'u8[8192]{0}', space=vmem, size = 0x2000, scoped, tag = 'input window, operand 0, single buffered']
    #allocation5 [shape = 's32[1]{0}', space=sflag, size = 0x4, scoped, tag = 'scoped memory for tpu_custom_call.1']
    #allocation6 [shape = 's32[1]{0}', space=sflag, size = 0x4, scoped, tag = 'scoped memory for tpu_custom_call.1']
    #allocation7 [shape = 'u8[196608]{0}', space=vmem, size = 0x30000, scoped, tag = 'input window, operand 1, single buffered']
    #allocation8 [shape = 's32[1]{0}', space=sflag, size = 0x4, scoped, tag = 'scoped memory for tpu_custom_call.1']
    #allocation9 [shape = 'u8[65536]{0}', space=vmem, size = 0x10000, scoped, tag = 'input window, operand 2, single buffered']
    #allocation10 [shape = 'u8[8192]{0}', space=vmem, size = 0x2000, scoped, tag = 'output window, operand 0, single buffered']
    %9 = vsyncpa [#allocation5], 0
    %10 = vsyncpa [#allocation8], 0
    %11 = vsyncpa [#allocation6], 0
    // Predicated region
    $region2: #{tpu_custom_call.1} parent=1 // pred_check
      _
    $region3: #{tpu_custom_call.1} parent=1 // pred_check_branch
      %13 = sbr.rel (0) target = $region5
    $region4: #{tpu_custom_call.1} parent=1 // pred_region
      %s15 = ssub.s32 256, 256
      %16 = vsyncadd [#allocation5], %s15
      %s17 = sshll.u32 [#allocation4], 4
      %s18 = int_to_ptr.vmem [resolvable:$true] %s17
      %23 = dma.hbm_to_vmem [thread:$0]  %s0, 256, %s18, [#allocation5], 128, 128, 8
    $region5: #{tpu_custom_call.1} parent=1 // pred_fallthru
      _
    // Predicated region
    $region6: #{tpu_custom_call.1} parent=1 // pred_check
      _
    $region7: #{tpu_custom_call.1} parent=1 // pred_check_branch
      %25 = sbr.rel (0) target = $region9
    $region8: #{tpu_custom_call.1} parent=1 // pred_region
      %s27 = ssub.s32 6144, 6144
      %28 = vsyncadd [#allocation8], %s27
      %s29 = sshll.u32 [#allocation7], 4
      %s30 = int_to_ptr.vmem [resolvable:$true] %s29
      %35 = dma.hbm_to_vmem [thread:$0]  %s1, 6144, %s30, [#allocation8], 384, 384, 24
    $region9: #{tpu_custom_call.1} parent=1 // pred_fallthru
      _
    // Predicated region
    $region10: #{tpu_custom_call.1} parent=1 // pred_check
      _
    $region11: #{tpu_custom_call.1} parent=1 // pred_check_branch
      %37 = sbr.rel (0) target = $region13
    $region12: #{tpu_custom_call.1} parent=1 // pred_region
      %s39 = ssub.s32 2048, 2048
      %40 = vsyncadd [#allocation8], %s39
      %s41 = sshll.u32 [#allocation9], 4
      %s42 = int_to_ptr.vmem [resolvable:$true] %s41
      %47 = dma.hbm_to_vmem [thread:$0]  %s2, 2048, %s42, [#allocation8], 128, 128, 8
    $region13: #{tpu_custom_call.1} parent=1 // pred_fallthru
      _
    // Predicated region
    $region14: #{tpu_custom_call.1} parent=1 // pred_check
      _
    $region15: #{tpu_custom_call.1} parent=1 // pred_check_branch
      %49 = sbr.rel (0) target = $region17
    $region16: #{tpu_custom_call.1} parent=1 // pred_region
      _
    $region17: #{tpu_custom_call.1} parent=1 // pred_fallthru
      _
    // Predicated region
    $region18: #{tpu_custom_call.1} parent=1 // pred_check
      _
    $region19: #{tpu_custom_call.1} parent=1 // pred_check_branch
      %51 = sbr.rel (0) target = $region21
    $region20: #{tpu_custom_call.1} parent=1 // pred_region
      %52 = dma.done [#allocation5], 256
    $region21: #{tpu_custom_call.1} parent=1 // pred_fallthru
      _
    // Predicated region
    $region22: #{tpu_custom_call.1} parent=1 // pred_check
      _
    $region23: #{tpu_custom_call.1} parent=1 // pred_check_branch
      %54 = sbr.rel (0) target = $region25
    $region24: #{tpu_custom_call.1} parent=1 // pred_region
      %55 = dma.done [#allocation8], 6144
    $region25: #{tpu_custom_call.1} parent=1 // pred_fallthru
      _
    // Predicated region
    $region26: #{tpu_custom_call.1} parent=1 // pred_check
      _
    $region27: #{tpu_custom_call.1} parent=1 // pred_check_branch
      %57 = sbr.rel (0) target = $region29
    $region28: #{tpu_custom_call.1} parent=1 // pred_region
      %58 = dma.done [#allocation8], 2048
    $region29: #{tpu_custom_call.1} parent=1 // pred_fallthru
      _
    %v59 = vld [vmem:[#allocation4] sm:$0xff]
    %v60 = vld [vmem:[#allocation4 + $0x8] sm:$0xff]
    %v61 = vld [vmem:[#allocation7] sm:$0xff]
    %v62 = vld [vmem:[#allocation7 + $0x8] sm:$0xff]
    %v63 = vld [vmem:[#allocation7 + $0x10] sm:$0xff]
    %v64 = vld [vmem:[#allocation7 + $0x18] sm:$0xff]
    %v65 = vld [vmem:[#allocation7 + $0x20] sm:$0xff]
    %v66 = vld [vmem:[#allocation7 + $0x28] sm:$0xff]
    %v67 = vld [vmem:[#allocation7 + $0x30] sm:$0xff]
    %v68 = vld [vmem:[#allocation7 + $0x38] sm:$0xff]
    %v69 = vld [vmem:[#allocation7 + $0x40] sm:$0xff]
    %v70 = vld [vmem:[#allocation7 + $0x48] sm:$0xff]
    %v71 = vld [vmem:[#allocation7 + $0x50] sm:$0xff]
    %v72 = vld [vmem:[#allocation7 + $0x58] sm:$0xff]
    %v73 = vld [vmem:[#allocation7 + $0x60] sm:$0xff]
    %v74 = vld [vmem:[#allocation7 + $0x68] sm:$0xff]
    %v75 = vld [vmem:[#allocation7 + $0x70] sm:$0xff]
    %v76 = vld [vmem:[#allocation7 + $0x78] sm:$0xff]
    %v77 = vld [vmem:[#allocation7 + $0x80] sm:$0xff]
    %v78 = vld [vmem:[#allocation7 + $0x88] sm:$0xff]
    %v79 = vld [vmem:[#allocation7 + $0x90] sm:$0xff]
    %v80 = vld [vmem:[#allocation7 + $0x98] sm:$0xff]
    %v81 = vld [vmem:[#allocation7 + $0xa0] sm:$0xff]
    %v82 = vld [vmem:[#allocation7 + $0xa8] sm:$0xff]
    %v83 = vld [vmem:[#allocation7 + $0xb0] sm:$0xff]
    %v84 = vld [vmem:[#allocation7 + $0xb8] sm:$0xff]
    %v85 = vld [vmem:[#allocation7 + $0xc0] sm:$0xff]
    %v86 = vld [vmem:[#allocation7 + $0xc8] sm:$0xff]
    %v87 = vld [vmem:[#allocation7 + $0xd0] sm:$0xff]
    %v88 = vld [vmem:[#allocation7 + $0xd8] sm:$0xff]
    %v89 = vld [vmem:[#allocation7 + $0xe0] sm:$0xff]
    %v90 = vld [vmem:[#allocation7 + $0xe8] sm:$0xff]
    %v91 = vld [vmem:[#allocation7 + $0xf0] sm:$0xff]
    %v92 = vld [vmem:[#allocation7 + $0xf8] sm:$0xff]
    %v93 = vld [vmem:[#allocation7 + $0x100] sm:$0xff]
    %v94 = vld [vmem:[#allocation7 + $0x108] sm:$0xff]
    %v95 = vld [vmem:[#allocation7 + $0x110] sm:$0xff]
    %v96 = vld [vmem:[#allocation7 + $0x118] sm:$0xff]
    %v97 = vld [vmem:[#allocation7 + $0x120] sm:$0xff]
    %v98 = vld [vmem:[#allocation7 + $0x128] sm:$0xff]
    %v99 = vld [vmem:[#allocation7 + $0x130] sm:$0xff]
    %v100 = vld [vmem:[#allocation7 + $0x138] sm:$0xff]
    %v101 = vld [vmem:[#allocation7 + $0x140] sm:$0xff]
    %v102 = vld [vmem:[#allocation7 + $0x148] sm:$0xff]
    %v103 = vld [vmem:[#allocation7 + $0x150] sm:$0xff]
    %v104 = vld [vmem:[#allocation7 + $0x158] sm:$0xff]
    %v105 = vld [vmem:[#allocation7 + $0x160] sm:$0xff]
    %v106 = vld [vmem:[#allocation7 + $0x168] sm:$0xff]
    %v107 = vld [vmem:[#allocation7 + $0x170] sm:$0xff]
    %v108 = vld [vmem:[#allocation7 + $0x178] sm:$0xff]
    %109 = vmatprep.subr.mxu0 %v62
    %110 = vmatpush1.msra.mxu0 %v61
    %111 = vmatprep.subr.mxu0 %v65
    %112 = vmatpush1.msra.mxu0 %v64
    %113 = vmatprep.subr.mxu0 %v68
    %114 = vmatpush1.msra.mxu0 %v67
    %115 = vmatprep.subr.mxu0 %v71
    %116 = vmatpush1.msra.mxu0 %v70
    %117 = vmatprep.subr.mxu0 %v74
    %118 = vmatpush1.msra.mxu0 %v73
    %119 = vmatprep.subr.mxu0 %v77
    %120 = vmatpush1.msra.mxu0 %v76
    %121 = vmatprep.subr.mxu0 %v80
    %122 = vmatpush1.msra.mxu0 %v79
    %123 = vmatprep.subr.mxu0 %v83
    %124 = vmatpush1.msra.mxu0 %v82
    %125 = vmatprep.subr.mxu0 %v86
    %126 = vmatpush1.msra.mxu0 %v85
    %127 = vmatprep.subr.mxu0 %v89
    %128 = vmatpush1.msra.mxu0 %v88
    %129 = vmatprep.subr.mxu0 %v92
    %130 = vmatpush1.msra.mxu0 %v91
    %131 = vmatprep.subr.mxu0 %v95
    %132 = vmatpush1.msra.mxu0 %v94
    %133 = vmatprep.subr.mxu0 %v98
    %134 = vmatpush1.msra.mxu0 %v97
    %135 = vmatprep.subr.mxu0 %v101
    %136 = vmatpush1.msra.mxu0 %v100
    %137 = vmatprep.subr.mxu0 %v104
    %138 = vmatpush1.msra.mxu0 %v103
    %139 = vmatprep.subr.mxu0 %v107
    %140 = vmatpush1.msra.mxu0 %v106
    %141 = vmatprep.subr.mxu0 0.0
    %142 = vmatpush1.msra.mxu0 0.0
    %143 = vmatprep.subr.mxu0 0.0
    %144 = vmatpush1.msra.mxu0 0.0
    %145 = vmatprep.subr.mxu0 0.0
    %146 = vmatpush1.msra.mxu0 0.0
    %147 = vmatprep.subr.mxu0 0.0
    %148 = vmatpush1.msra.mxu0 0.0
    %149 = vmatprep.subr.mxu0 0.0
    %150 = vmatpush1.msra.mxu0 0.0
    %151 = vmatprep.subr.mxu0 0.0
    %152 = vmatpush1.msra.mxu0 0.0
    %153 = vmatprep.subr.mxu0 0.0
    %154 = vmatpush1.msra.mxu0 0.0
    %155 = vmatprep.subr.mxu0 0.0
    %156 = vmatpush1.msra.mxu0 0.0
    %157 = vmatprep.subr.mxu0 0.0
    %158 = vmatpush1.msra.mxu0 0.0
    %159 = vmatprep.subr.mxu0 0.0
    %160 = vmatpush1.msra.mxu0 0.0
    %161 = vmatprep.subr.mxu0 0.0
    %162 = vmatpush1.msra.mxu0 0.0
    %163 = vmatprep.subr.mxu0 0.0
    %164 = vmatpush1.msra.mxu0 0.0
    %165 = vmatprep.subr.mxu0 0.0
    %166 = vmatpush1.msra.mxu0 0.0
    %167 = vmatprep.subr.mxu0 0.0
    %168 = vmatpush1.msra.mxu0 0.0
    %169 = vmatprep.subr.mxu0 0.0
    %170 = vmatpush1.msra.mxu0 0.0
    %171 = vmatprep.subr.mxu0 0.0
    %172 = vmatpush1.msra.mxu0 0.0
    %173 = vmatprep.mubr.f32.mxu0 0.0
    %174 = vmatmul.mubr.f32.gmra.mrb[0].mxu0 %v59
    %v175 = vpop.f32.mrb[0].mxu0
    %v176 = vadd.f32 0.0, %v175
    %v177 = vpop.f32.mrb[0].mxu0
    %v178 = vadd.f32 0.0, %v177
    %179 = vmatprep.mubr.f32.mxu0 0.0
    %180 = vmatmul.mubr.f32.gmra.mrb[0].mxu0 %v60
    %v181 = vpop.f32.mrb[0].mxu0
    %v182 = vadd.f32 0.0, %v181
    %v183 = vpop.f32.mrb[0].mxu0
    %v184 = vadd.f32 0.0, %v183
    %185 = vdwg.mxu0
    %186 = vmatprep.subr.mxu0 0.0
    %187 = vmatpush1.msra.mxu0 %v63
    %188 = vmatprep.subr.mxu0 0.0
    %189 = vmatpush1.msra.mxu0 %v66
    %190 = vmatprep.subr.mxu0 0.0
    %191 = vmatpush1.msra.mxu0 %v69
    %192 = vmatprep.subr.mxu0 0.0
    %193 = vmatpush1.msra.mxu0 %v72
    %194 = vmatprep.subr.mxu0 0.0
    %195 = vmatpush1.msra.mxu0 %v75
    %196 = vmatprep.subr.mxu0 0.0
    %197 = vmatpush1.msra.mxu0 %v78
    %198 = vmatprep.subr.mxu0 0.0
    %199 = vmatpush1.msra.mxu0 %v81
    %200 = vmatprep.subr.mxu0 0.0
    %201 = vmatpush1.msra.mxu0 %v84
    %202 = vmatprep.subr.mxu0 0.0
    %203 = vmatpush1.msra.mxu0 %v87
    %204 = vmatprep.subr.mxu0 0.0
    %205 = vmatpush1.msra.mxu0 %v90
    %206 = vmatprep.subr.mxu0 0.0
    %207 = vmatpush1.msra.mxu0 %v93
    %208 = vmatprep.subr.mxu0 0.0
    %209 = vmatpush1.msra.mxu0 %v96
    %210 = vmatprep.subr.mxu0 0.0
    %211 = vmatpush1.msra.mxu0 %v99
    %212 = vmatprep.subr.mxu0 0.0
    %213 = vmatpush1.msra.mxu0 %v102
    %214 = vmatprep.subr.mxu0 0.0
    %215 = vmatpush1.msra.mxu0 %v105
    %216 = vmatprep.subr.mxu0 0.0
    %217 = vmatpush1.msra.mxu0 %v108
    %218 = vmatprep.subr.mxu0 0.0
    %219 = vmatpush1.msra.mxu0 0.0
    %220 = vmatprep.subr.mxu0 0.0
    %221 = vmatpush1.msra.mxu0 0.0
    %222 = vmatprep.subr.mxu0 0.0
    %223 = vmatpush1.msra.mxu0 0.0
    %224 = vmatprep.subr.mxu0 0.0
    %225 = vmatpush1.msra.mxu0 0.0
    %226 = vmatprep.subr.mxu0 0.0
    %227 = vmatpush1.msra.mxu0 0.0
    %228 = vmatprep.subr.mxu0 0.0
    %229 = vmatpush1.msra.mxu0 0.0
    %230 = vmatprep.subr.mxu0 0.0
    %231 = vmatpush1.msra.mxu0 0.0
    %232 = vmatprep.subr.mxu0 0.0
    %233 = vmatpush1.msra.mxu0 0.0
    %234 = vmatprep.subr.mxu0 0.0
    %235 = vmatpush1.msra.mxu0 0.0
    %236 = vmatprep.subr.mxu0 0.0
    %237 = vmatpush1.msra.mxu0 0.0
    %238 = vmatprep.subr.mxu0 0.0
    %239 = vmatpush1.msra.mxu0 0.0
    %240 = vmatprep.subr.mxu0 0.0
    %241 = vmatpush1.msra.mxu0 0.0
    %242 = vmatprep.subr.mxu0 0.0
    %243 = vmatpush1.msra.mxu0 0.0
    %244 = vmatprep.subr.mxu0 0.0
    %245 = vmatpush1.msra.mxu0 0.0
    %246 = vmatprep.subr.mxu0 0.0
    %247 = vmatpush1.msra.mxu0 0.0
    %248 = vmatprep.subr.mxu0 0.0
    %249 = vmatpush1.msra.mxu0 0.0
    %250 = vmatprep.mubr.f32.mxu0 0.0
    %251 = vmatmul.mubr.f32.gmra.mrb[0].mxu0 %v59
    %v252 = vpop.f32.mrb[0].mxu0
    %v253 = vadd.f32 0.0, %v252
    %v254 = vpop.f32.mrb[0].mxu0
    %255 = vmatprep.mubr.f32.mxu0 0.0
    %256 = vmatmul.mubr.f32.gmra.mrb[0].mxu0 %v60
    %v257 = vpop.f32.mrb[0].mxu0
    %v258 = vadd.f32 0.0, %v257
    %v259 = vpop.f32.mrb[0].mxu0
    %260 = vdwg.mxu0
    %261 = vst [vmem:[#allocation2] sm:$0xff] %v176
    %262 = vst [vmem:[#allocation2 + $0x8] sm:$0xff] %v178
    %263 = vst [vmem:[#allocation2 + $0x10] sm:$0xff] %v253
    %264 = vst [vmem:[#allocation2 + $0x18] sm:$0xff] %v182
    %265 = vst [vmem:[#allocation2 + $0x20] sm:$0xff] %v184
    %266 = vst [vmem:[#allocation2 + $0x28] sm:$0xff] %v258
    %v267 = vlaneseq
    %v268 = vshrl.u32 %v267, 7
    %v269 = vlaneseq
    %v270 = vand.u32 %v269, 127
    %vm271 = vcmp.le.s32.totalorder %v270, %v268
    loop: start=0, step=1, limit=2
    $region30: #{tpu_custom_call.1} parent=1 // loop_pre_header
      _
    $region31: #{tpu_custom_call.1} parent=1 // loop_header
      %s273 = sphi 0, %s277
      %p274 = scmp.ge.s32.totalorder %s273, 2
    $region32: #{tpu_custom_call.1} parent=1 // loop_header_branch
      %276 = sbr.rel (%p274) target = $region36
    $region33: #{tpu_custom_call.1} parent=1 // loop_body
      %s278 = smul.u32 %s273, 8
      %s279 = sshra.s32 %s278, 3
      %s280 = sand.u32 %s278, 7
      %s281 = smul.u32 %s279, 3
      %s282 = smul.addr %s281, 8
      %s283 = scalar_lea.vmem [#allocation2], %s282
      %v284 = vld [vmem:[%s283] sm:$0xff]
      %v285 = vld [vmem:[%s283 + $0x8] sm:$0xff]
      %v286 = vld [vmem:[%s283 + $0x10] sm:$0xff]
      %vm287 = vcmask 261120
      %v289 = vsel %vm287, %v284, 0
      %v292 = vsel %vm287, %v285, 0
      %294 = vmatprep.subr.mxu0 0.0
      %295 = vmatpush1.xpose.msra.mxu0 %v292
      %296 = vmatprep.subr.mxu0 0.0
      %297 = vmatpush1.xpose.msra.mxu0 0.0
      %298 = vmatprep.subr.mxu0 0.0
      %299 = vmatpush1.xpose.msra.mxu0 0.0
      %300 = vmatprep.subr.mxu0 0.0
      %301 = vmatpush1.xpose.msra.mxu0 0.0
      %302 = vmatprep.subr.mxu0 0.0
      %303 = vmatpush1.xpose.msra.mxu0 0.0
      %304 = vmatprep.subr.mxu0 0.0
      %305 = vmatpush1.xpose.msra.mxu0 0.0
      %306 = vmatprep.subr.mxu0 0.0
      %307 = vmatpush1.xpose.msra.mxu0 0.0
      %308 = vmatprep.subr.mxu0 0.0
      %309 = vmatpush1.xpose.msra.mxu0 0.0
      %310 = vmatprep.subr.mxu0 0.0
      %311 = vmatpush1.xpose.msra.mxu0 0.0
      %312 = vmatprep.subr.mxu0 0.0
      %313 = vmatpush1.xpose.msra.mxu0 0.0
      %314 = vmatprep.subr.mxu0 0.0
      %315 = vmatpush1.xpose.msra.mxu0 0.0
      %316 = vmatprep.subr.mxu0 0.0
      %317 = vmatpush1.xpose.msra.mxu0 0.0
      %318 = vmatprep.subr.mxu0 0.0
      %319 = vmatpush1.xpose.msra.mxu0 0.0
      %320 = vmatprep.subr.mxu0 0.0
      %321 = vmatpush1.xpose.msra.mxu0 0.0
      %322 = vmatprep.subr.mxu0 0.0
      %323 = vmatpush1.xpose.msra.mxu0 0.0
      %324 = vmatprep.subr.mxu0 0.0
      %325 = vmatpush1.xpose.msra.mxu0 0.0
      %326 = vmatprep.subr.mxu0 0.0
      %327 = vmatpush1.xpose.msra.mxu0 0.0
      %328 = vmatprep.subr.mxu0 0.0
      %329 = vmatpush1.xpose.msra.mxu0 0.0
      %330 = vmatprep.subr.mxu0 0.0
      %331 = vmatpush1.xpose.msra.mxu0 0.0
      %332 = vmatprep.subr.mxu0 0.0
      %333 = vmatpush1.xpose.msra.mxu0 0.0
      %334 = vmatprep.subr.mxu0 0.0
      %335 = vmatpush1.xpose.msra.mxu0 0.0
      %336 = vmatprep.subr.mxu0 0.0
      %337 = vmatpush1.xpose.msra.mxu0 0.0
      %338 = vmatprep.subr.mxu0 0.0
      %339 = vmatpush1.xpose.msra.mxu0 0.0
      %340 = vmatprep.subr.mxu0 0.0
      %341 = vmatpush1.xpose.msra.mxu0 0.0
      %342 = vmatprep.subr.mxu0 0.0
      %343 = vmatpush1.xpose.msra.mxu0 0.0
      %344 = vmatprep.subr.mxu0 0.0
      %345 = vmatpush1.xpose.msra.mxu0 0.0
      %346 = vmatprep.subr.mxu0 0.0
      %347 = vmatpush1.xpose.msra.mxu0 0.0
      %348 = vmatprep.subr.mxu0 0.0
      %349 = vmatpush1.xpose.msra.mxu0 0.0
      %350 = vmatprep.subr.mxu0 0.0
      %351 = vmatpush1.xpose.msra.mxu0 0.0
      %352 = vmatprep.subr.mxu0 0.0
      %353 = vmatpush1.xpose.msra.mxu0 0.0
      %354 = vmatprep.subr.mxu0 0.0
      %355 = vmatpush1.xpose.msra.mxu0 0.0
      %356 = vmatprep.subr.mxu0 0.0
      %357 = vmatpush1.xpose.msra.mxu0 0.0
      %358 = vmatprep.mubr.f32.mxu0 0.0
      %359 = vmatmul.mubr.f32.gmra.mrb[0].mxu0 %v289
      %v360 = vpop.f32.mrb[0].mxu0
      %v361 = vadd.f32 0.0, %v360
      %v362 = vpop.f32.mrb[0].mxu0
      %363 = vdwg.mxu0
      %v364 = vmul.f32 %v361, 0.17677669
      %v365 = vsel %vm271, %v364, -inf
      %vm366 = vcmask 64512
      %v367 = vsel %vm366, %v365, -inf
      %368 = vmax.xlane.f32.xlu0 %v367
      %v369 = vpop.xlane.xlu0 %368
      %v370 = vsub.f32 %v365, %v369
      %v371 = vmul.f32 %v370, 1.442695
      %v372 = vpow.pop %v371
      %v373 = vsel %vm366, %v372, 0.0
      %374 = vadd.xlane.f32.xlu0 %v373
      %v375 = vpop.xlane.xlu0 %374
      %v376 = vrcp.pop %v375
      %v377 = vmul.f32 %v372, %v376
      %v379 = vsel %vm366, %v377, 0
      %381 = vmatprep.subr.mxu0 0.0
      %382 = vmatpush1.msra.mxu0 %v286
      %383 = vmatprep.subr.mxu0 0.0
      %384 = vmatpush1.msra.mxu0 0.0
      %385 = vmatprep.subr.mxu0 0.0
      %386 = vmatpush1.msra.mxu0 0.0
      %387 = vmatprep.subr.mxu0 0.0
      %388 = vmatpush1.msra.mxu0 0.0
      %389 = vmatprep.subr.mxu0 0.0
      %390 = vmatpush1.msra.mxu0 0.0
      %391 = vmatprep.subr.mxu0 0.0
      %392 = vmatpush1.msra.mxu0 0.0
      %393 = vmatprep.subr.mxu0 0.0
      %394 = vmatpush1.msra.mxu0 0.0
      %395 = vmatprep.subr.mxu0 0.0
      %396 = vmatpush1.msra.mxu0 0.0
      %397 = vmatprep.subr.mxu0 0.0
      %398 = vmatpush1.msra.mxu0 0.0
      %399 = vmatprep.subr.mxu0 0.0
      %400 = vmatpush1.msra.mxu0 0.0
      %401 = vmatprep.subr.mxu0 0.0
      %402 = vmatpush1.msra.mxu0 0.0
      %403 = vmatprep.subr.mxu0 0.0
      %404 = vmatpush1.msra.mxu0 0.0
      %405 = vmatprep.subr.mxu0 0.0
      %406 = vmatpush1.msra.mxu0 0.0
      %407 = vmatprep.subr.mxu0 0.0
      %408 = vmatpush1.msra.mxu0 0.0
      %409 = vmatprep.subr.mxu0 0.0
      %410 = vmatpush1.msra.mxu0 0.0
      %411 = vmatprep.subr.mxu0 0.0
      %412 = vmatpush1.msra.mxu0 0.0
      %413 = vmatprep.subr.mxu0 0.0
      %414 = vmatpush1.msra.mxu0 0.0
      %415 = vmatprep.subr.mxu0 0.0
      %416 = vmatpush1.msra.mxu0 0.0
      %417 = vmatprep.subr.mxu0 0.0
      %418 = vmatpush1.msra.mxu0 0.0
      %419 = vmatprep.subr.mxu0 0.0
      %420 = vmatpush1.msra.mxu0 0.0
      %421 = vmatprep.subr.mxu0 0.0
      %422 = vmatpush1.msra.mxu0 0.0
      %423 = vmatprep.subr.mxu0 0.0
      %424 = vmatpush1.msra.mxu0 0.0
      %425 = vmatprep.subr.mxu0 0.0
      %426 = vmatpush1.msra.mxu0 0.0
      %427 = vmatprep.subr.mxu0 0.0
      %428 = vmatpush1.msra.mxu0 0.0
      %429 = vmatprep.subr.mxu0 0.0
      %430 = vmatpush1.msra.mxu0 0.0
      %431 = vmatprep.subr.mxu0 0.0
      %432 = vmatpush1.msra.mxu0 0.0
      %433 = vmatprep.subr.mxu0 0.0
      %434 = vmatpush1.msra.mxu0 0.0
      %435 = vmatprep.subr.mxu0 0.0
      %436 = vmatpush1.msra.mxu0 0.0
      %437 = vmatprep.subr.mxu0 0.0
      %438 = vmatpush1.msra.mxu0 0.0
      %439 = vmatprep.subr.mxu0 0.0
      %440 = vmatpush1.msra.mxu0 0.0
      %441 = vmatprep.subr.mxu0 0.0
      %442 = vmatpush1.msra.mxu0 0.0
      %443 = vmatprep.subr.mxu0 0.0
      %444 = vmatpush1.msra.mxu0 0.0
      %445 = vmatprep.mubr.f32.mxu0 0.0
      %446 = vmatmul.mubr.f32.gmra.mrb[0].mxu0 %v379
      %v447 = vpop.f32.mrb[0].mxu0
      %v448 = vadd.f32 0.0, %v447
      %v449 = vpop.f32.mrb[0].mxu0
      %450 = vdwg.mxu0
      %451 = vrot.lane.b32.xlu0 %v284, 96
      %v452 = vpop.permute.xlu0 %451
      %453 = vrot.lane.b32.xlu0 %v285, 96
      %v454 = vpop.permute.xlu0 %453
      %v455 = vsel %vm287, %v452, 0
      %v457 = vsel %vm287, %v454, 0
      %459 = vmatprep.subr.mxu0 0.0
      %460 = vmatpush1.xpose.msra.mxu0 %v457
      %461 = vmatprep.subr.mxu0 0.0
      %462 = vmatpush1.xpose.msra.mxu0 0.0
      %463 = vmatprep.subr.mxu0 0.0
      %464 = vmatpush1.xpose.msra.mxu0 0.0
      %465 = vmatprep.subr.mxu0 0.0
      %466 = vmatpush1.xpose.msra.mxu0 0.0
      %467 = vmatprep.subr.mxu0 0.0
      %468 = vmatpush1.xpose.msra.mxu0 0.0
      %469 = vmatprep.subr.mxu0 0.0
      %470 = vmatpush1.xpose.msra.mxu0 0.0
      %471 = vmatprep.subr.mxu0 0.0
      %472 = vmatpush1.xpose.msra.mxu0 0.0
      %473 = vmatprep.subr.mxu0 0.0
      %474 = vmatpush1.xpose.msra.mxu0 0.0
      %475 = vmatprep.subr.mxu0 0.0
      %476 = vmatpush1.xpose.msra.mxu0 0.0
      %477 = vmatprep.subr.mxu0 0.0
      %478 = vmatpush1.xpose.msra.mxu0 0.0
      %479 = vmatprep.subr.mxu0 0.0
      %480 = vmatpush1.xpose.msra.mxu0 0.0
      %481 = vmatprep.subr.mxu0 0.0
      %482 = vmatpush1.xpose.msra.mxu0 0.0
      %483 = vmatprep.subr.mxu0 0.0
      %484 = vmatpush1.xpose.msra.mxu0 0.0
      %485 = vmatprep.subr.mxu0 0.0
      %486 = vmatpush1.xpose.msra.mxu0 0.0
      %487 = vmatprep.subr.mxu0 0.0
      %488 = vmatpush1.xpose.msra.mxu0 0.0
      %489 = vmatprep.subr.mxu0 0.0
      %490 = vmatpush1.xpose.msra.mxu0 0.0
      %491 = vmatprep.subr.mxu0 0.0
      %492 = vmatpush1.xpose.msra.mxu0 0.0
      %493 = vmatprep.subr.mxu0 0.0
      %494 = vmatpush1.xpose.msra.mxu0 0.0
      %495 = vmatprep.subr.mxu0 0.0
      %496 = vmatpush1.xpose.msra.mxu0 0.0
      %497 = vmatprep.subr.mxu0 0.0
      %498 = vmatpush1.xpose.msra.mxu0 0.0
      %499 = vmatprep.subr.mxu0 0.0
      %500 = vmatpush1.xpose.msra.mxu0 0.0
      %501 = vmatprep.subr.mxu0 0.0
      %502 = vmatpush1.xpose.msra.mxu0 0.0
      %503 = vmatprep.subr.mxu0 0.0
      %504 = vmatpush1.xpose.msra.mxu0 0.0
      %505 = vmatprep.subr.mxu0 0.0
      %506 = vmatpush1.xpose.msra.mxu0 0.0
      %507 = vmatprep.subr.mxu0 0.0
      %508 = vmatpush1.xpose.msra.mxu0 0.0
      %509 = vmatprep.subr.mxu0 0.0
      %510 = vmatpush1.xpose.msra.mxu0 0.0
      %511 = vmatprep.subr.mxu0 0.0
      %512 = vmatpush1.xpose.msra.mxu0 0.0
      %513 = vmatprep.subr.mxu0 0.0
      %514 = vmatpush1.xpose.msra.mxu0 0.0
      %515 = vmatprep.subr.mxu0 0.0
      %516 = vmatpush1.xpose.msra.mxu0 0.0
      %517 = vmatprep.subr.mxu0 0.0
      %518 = vmatpush1.xpose.msra.mxu0 0.0
      %519 = vmatprep.subr.mxu0 0.0
      %520 = vmatpush1.xpose.msra.mxu0 0.0
      %521 = vmatprep.subr.mxu0 0.0
      %522 = vmatpush1.xpose.msra.mxu0 0.0
      %523 = vmatprep.mubr.f32.mxu0 0.0
      %524 = vmatmul.mubr.f32.gmra.mrb[0].mxu0 %v455
      %v525 = vpop.f32.mrb[0].mxu0
      %v526 = vadd.f32 0.0, %v525
      %v527 = vpop.f32.mrb[0].mxu0
      %528 = vdwg.mxu0
      %v529 = vmul.f32 %v526, 0.17677669
      %v530 = vsel %vm271, %v529, -inf
      %v531 = vsel %vm366, %v530, -inf
      %532 = vmax.xlane.f32.xlu0 %v531
      %v533 = vpop.xlane.xlu0 %532
      %v534 = vsub.f32 %v530, %v533
      %v535 = vmul.f32 %v534, 1.442695
      %v536 = vpow.pop %v535
      %v537 = vsel %vm366, %v536, 0.0
      %538 = vadd.xlane.f32.xlu0 %v537
      %v539 = vpop.xlane.xlu0 %538
      %v540 = vrcp.pop %v539
      %v541 = vmul.f32 %v536, %v540
      %543 = vrot.lane.b32.xlu0 %v286, 96
      %v544 = vpop.permute.xlu0 %543
      %v547 = vsel %vm366, %v541, 0
      %549 = vmatprep.subr.mxu0 0.0
      %550 = vmatpush1.msra.mxu0 %v544
      %551 = vmatprep.subr.mxu0 0.0
      %552 = vmatpush1.msra.mxu0 0.0
      %553 = vmatprep.subr.mxu0 0.0
      %554 = vmatpush1.msra.mxu0 0.0
      %555 = vmatprep.subr.mxu0 0.0
      %556 = vmatpush1.msra.mxu0 0.0
      %557 = vmatprep.subr.mxu0 0.0
      %558 = vmatpush1.msra.mxu0 0.0
      %559 = vmatprep.subr.mxu0 0.0
      %560 = vmatpush1.msra.mxu0 0.0
      %561 = vmatprep.subr.mxu0 0.0
      %562 = vmatpush1.msra.mxu0 0.0
      %563 = vmatprep.subr.mxu0 0.0
      %564 = vmatpush1.msra.mxu0 0.0
      %565 = vmatprep.subr.mxu0 0.0
      %566 = vmatpush1.msra.mxu0 0.0
      %567 = vmatprep.subr.mxu0 0.0
      %568 = vmatpush1.msra.mxu0 0.0
      %569 = vmatprep.subr.mxu0 0.0
      %570 = vmatpush1.msra.mxu0 0.0
      %571 = vmatprep.subr.mxu0 0.0
      %572 = vmatpush1.msra.mxu0 0.0
      %573 = vmatprep.subr.mxu0 0.0
      %574 = vmatpush1.msra.mxu0 0.0
      %575 = vmatprep.subr.mxu0 0.0
      %576 = vmatpush1.msra.mxu0 0.0
      %577 = vmatprep.subr.mxu0 0.0
      %578 = vmatpush1.msra.mxu0 0.0
      %579 = vmatprep.subr.mxu0 0.0
      %580 = vmatpush1.msra.mxu0 0.0
      %581 = vmatprep.subr.mxu0 0.0
      %582 = vmatpush1.msra.mxu0 0.0
      %583 = vmatprep.subr.mxu0 0.0
      %584 = vmatpush1.msra.mxu0 0.0
      %585 = vmatprep.subr.mxu0 0.0
      %586 = vmatpush1.msra.mxu0 0.0
      %587 = vmatprep.subr.mxu0 0.0
      %588 = vmatpush1.msra.mxu0 0.0
      %589 = vmatprep.subr.mxu0 0.0
      %590 = vmatpush1.msra.mxu0 0.0
      %591 = vmatprep.subr.mxu0 0.0
      %592 = vmatpush1.msra.mxu0 0.0
      %593 = vmatprep.subr.mxu0 0.0
      %594 = vmatpush1.msra.mxu0 0.0
      %595 = vmatprep.subr.mxu0 0.0
      %596 = vmatpush1.msra.mxu0 0.0
      %597 = vmatprep.subr.mxu0 0.0
      %598 = vmatpush1.msra.mxu0 0.0
      %599 = vmatprep.subr.mxu0 0.0
      %600 = vmatpush1.msra.mxu0 0.0
      %601 = vmatprep.subr.mxu0 0.0
      %602 = vmatpush1.msra.mxu0 0.0
      %603 = vmatprep.subr.mxu0 0.0
      %604 = vmatpush1.msra.mxu0 0.0
      %605 = vmatprep.subr.mxu0 0.0
      %606 = vmatpush1.msra.mxu0 0.0
      %607 = vmatprep.subr.mxu0 0.0
      %608 = vmatpush1.msra.mxu0 0.0
      %609 = vmatprep.subr.mxu0 0.0
      %610 = vmatpush1.msra.mxu0 0.0
      %611 = vmatprep.subr.mxu0 0.0
      %612 = vmatpush1.msra.mxu0 0.0
      %613 = vmatprep.mubr.f32.mxu0 0.0
      %614 = vmatmul.mubr.f32.gmra.mrb[0].mxu0 %v547
      %v615 = vpop.f32.mrb[0].mxu0
      %v616 = vadd.f32 0.0, %v615
      %v617 = vpop.f32.mrb[0].mxu0
      %618 = vdwg.mxu0
      %619 = vrot.lane.b32.xlu0 %v284, 64
      %v620 = vpop.permute.xlu0 %619
      %621 = vrot.lane.b32.xlu0 %v285, 64
      %v622 = vpop.permute.xlu0 %621
      %v623 = vsel %vm287, %v620, 0
      %v625 = vsel %vm287, %v622, 0
      %627 = vmatprep.subr.mxu0 0.0
      %628 = vmatpush1.xpose.msra.mxu0 %v625
      %629 = vmatprep.subr.mxu0 0.0
      %630 = vmatpush1.xpose.msra.mxu0 0.0
      %631 = vmatprep.subr.mxu0 0.0
      %632 = vmatpush1.xpose.msra.mxu0 0.0
      %633 = vmatprep.subr.mxu0 0.0
      %634 = vmatpush1.xpose.msra.mxu0 0.0
      %635 = vmatprep.subr.mxu0 0.0
      %636 = vmatpush1.xpose.msra.mxu0 0.0
      %637 = vmatprep.subr.mxu0 0.0
      %638 = vmatpush1.xpose.msra.mxu0 0.0
      %639 = vmatprep.subr.mxu0 0.0
      %640 = vmatpush1.xpose.msra.mxu0 0.0
      %641 = vmatprep.subr.mxu0 0.0
      %642 = vmatpush1.xpose.msra.mxu0 0.0
      %643 = vmatprep.subr.mxu0 0.0
      %644 = vmatpush1.xpose.msra.mxu0 0.0
      %645 = vmatprep.subr.mxu0 0.0
      %646 = vmatpush1.xpose.msra.mxu0 0.0
      %647 = vmatprep.subr.mxu0 0.0
      %648 = vmatpush1.xpose.msra.mxu0 0.0
      %649 = vmatprep.subr.mxu0 0.0
      %650 = vmatpush1.xpose.msra.mxu0 0.0
      %651 = vmatprep.subr.mxu0 0.0
      %652 = vmatpush1.xpose.msra.mxu0 0.0
      %653 = vmatprep.subr.mxu0 0.0
      %654 = vmatpush1.xpose.msra.mxu0 0.0
      %655 = vmatprep.subr.mxu0 0.0
      %656 = vmatpush1.xpose.msra.mxu0 0.0
      %657 = vmatprep.subr.mxu0 0.0
      %658 = vmatpush1.xpose.msra.mxu0 0.0
      %659 = vmatprep.subr.mxu0 0.0
      %660 = vmatpush1.xpose.msra.mxu0 0.0
      %661 = vmatprep.subr.mxu0 0.0
      %662 = vmatpush1.xpose.msra.mxu0 0.0
      %663 = vmatprep.subr.mxu0 0.0
      %664 = vmatpush1.xpose.msra.mxu0 0.0
      %665 = vmatprep.subr.mxu0 0.0
      %666 = vmatpush1.xpose.msra.mxu0 0.0
      %667 = vmatprep.subr.mxu0 0.0
      %668 = vmatpush1.xpose.msra.mxu0 0.0
      %669 = vmatprep.subr.mxu0 0.0
      %670 = vmatpush1.xpose.msra.mxu0 0.0
      %671 = vmatprep.subr.mxu0 0.0
      %672 = vmatpush1.xpose.msra.mxu0 0.0
      %673 = vmatprep.subr.mxu0 0.0
      %674 = vmatpush1.xpose.msra.mxu0 0.0
      %675 = vmatprep.subr.mxu0 0.0
      %676 = vmatpush1.xpose.msra.mxu0 0.0
      %677 = vmatprep.subr.mxu0 0.0
      %678 = vmatpush1.xpose.msra.mxu0 0.0
      %679 = vmatprep.subr.mxu0 0.0
      %680 = vmatpush1.xpose.msra.mxu0 0.0
      %681 = vmatprep.subr.mxu0 0.0
      %682 = vmatpush1.xpose.msra.mxu0 0.0
      %683 = vmatprep.subr.mxu0 0.0
      %684 = vmatpush1.xpose.msra.mxu0 0.0
      %685 = vmatprep.subr.mxu0 0.0
      %686 = vmatpush1.xpose.msra.mxu0 0.0
      %687 = vmatprep.subr.mxu0 0.0
      %688 = vmatpush1.xpose.msra.mxu0 0.0
      %689 = vmatprep.subr.mxu0 0.0
      %690 = vmatpush1.xpose.msra.mxu0 0.0
      %691 = vmatprep.mubr.f32.mxu0 0.0
      %692 = vmatmul.mubr.f32.gmra.mrb[0].mxu0 %v623
      %v693 = vpop.f32.mrb[0].mxu0
      %v694 = vadd.f32 0.0, %v693
      %v695 = vpop.f32.mrb[0].mxu0
      %696 = vdwg.mxu0
      %v697 = vmul.f32 %v694, 0.17677669
      %v698 = vsel %vm271, %v697, -inf
      %v699 = vsel %vm366, %v698, -inf
      %700 = vmax.xlane.f32.xlu0 %v699
      %v701 = vpop.xlane.xlu0 %700
      %v702 = vsub.f32 %v698, %v701
      %v703 = vmul.f32 %v702, 1.442695
      %v704 = vpow.pop %v703
      %v705 = vsel %vm366, %v704, 0.0
      %706 = vadd.xlane.f32.xlu0 %v705
      %v707 = vpop.xlane.xlu0 %706
      %v708 = vrcp.pop %v707
      %v709 = vmul.f32 %v704, %v708
      %710 = vrot.lane.b32.xlu0 %v286, 64
      %v711 = vpop.permute.xlu0 %710
      %v714 = vsel %vm366, %v709, 0
      %716 = vmatprep.subr.mxu0 0.0
      %717 = vmatpush1.msra.mxu0 %v711
      %718 = vmatprep.subr.mxu0 0.0
      %719 = vmatpush1.msra.mxu0 0.0
      %720 = vmatprep.subr.mxu0 0.0
      %721 = vmatpush1.msra.mxu0 0.0
      %722 = vmatprep.subr.mxu0 0.0
      %723 = vmatpush1.msra.mxu0 0.0
      %724 = vmatprep.subr.mxu0 0.0
      %725 = vmatpush1.msra.mxu0 0.0
      %726 = vmatprep.subr.mxu0 0.0
      %727 = vmatpush1.msra.mxu0 0.0
      %728 = vmatprep.subr.mxu0 0.0
      %729 = vmatpush1.msra.mxu0 0.0
      %730 = vmatprep.subr.mxu0 0.0
      %731 = vmatpush1.msra.mxu0 0.0
      %732 = vmatprep.subr.mxu0 0.0
      %733 = vmatpush1.msra.mxu0 0.0
      %734 = vmatprep.subr.mxu0 0.0
      %735 = vmatpush1.msra.mxu0 0.0
      %736 = vmatprep.subr.mxu0 0.0
      %737 = vmatpush1.msra.mxu0 0.0
      %738 = vmatprep.subr.mxu0 0.0
      %739 = vmatpush1.msra.mxu0 0.0
      %740 = vmatprep.subr.mxu0 0.0
      %741 = vmatpush1.msra.mxu0 0.0
      %742 = vmatprep.subr.mxu0 0.0
      %743 = vmatpush1.msra.mxu0 0.0
      %744 = vmatprep.subr.mxu0 0.0
      %745 = vmatpush1.msra.mxu0 0.0
      %746 = vmatprep.subr.mxu0 0.0
      %747 = vmatpush1.msra.mxu0 0.0
      %748 = vmatprep.subr.mxu0 0.0
      %749 = vmatpush1.msra.mxu0 0.0
      %750 = vmatprep.subr.mxu0 0.0
      %751 = vmatpush1.msra.mxu0 0.0
      %752 = vmatprep.subr.mxu0 0.0
      %753 = vmatpush1.msra.mxu0 0.0
      %754 = vmatprep.subr.mxu0 0.0
      %755 = vmatpush1.msra.mxu0 0.0
      %756 = vmatprep.subr.mxu0 0.0
      %757 = vmatpush1.msra.mxu0 0.0
      %758 = vmatprep.subr.mxu0 0.0
      %759 = vmatpush1.msra.mxu0 0.0
      %760 = vmatprep.subr.mxu0 0.0
      %761 = vmatpush1.msra.mxu0 0.0
      %762 = vmatprep.subr.mxu0 0.0
      %763 = vmatpush1.msra.mxu0 0.0
      %764 = vmatprep.subr.mxu0 0.0
      %765 = vmatpush1.msra.mxu0 0.0
      %766 = vmatprep.subr.mxu0 0.0
      %767 = vmatpush1.msra.mxu0 0.0
      %768 = vmatprep.subr.mxu0 0.0
      %769 = vmatpush1.msra.mxu0 0.0
      %770 = vmatprep.subr.mxu0 0.0
      %771 = vmatpush1.msra.mxu0 0.0
      %772 = vmatprep.subr.mxu0 0.0
      %773 = vmatpush1.msra.mxu0 0.0
      %774 = vmatprep.subr.mxu0 0.0
      %775 = vmatpush1.msra.mxu0 0.0
      %776 = vmatprep.subr.mxu0 0.0
      %777 = vmatpush1.msra.mxu0 0.0
      %778 = vmatprep.subr.mxu0 0.0
      %779 = vmatpush1.msra.mxu0 0.0
      %780 = vmatprep.mubr.f32.mxu0 0.0
      %781 = vmatmul.mubr.f32.gmra.mrb[0].mxu0 %v714
      %v782 = vpop.f32.mrb[0].mxu0
      %v783 = vadd.f32 0.0, %v782
      %v784 = vpop.f32.mrb[0].mxu0
      %785 = vdwg.mxu0
      %786 = vrot.lane.b32.xlu0 %v284, 32
      %v787 = vpop.permute.xlu0 %786
      %788 = vrot.lane.b32.xlu0 %v285, 32
      %v789 = vpop.permute.xlu0 %788
      %v790 = vsel %vm287, %v787, 0
      %v792 = vsel %vm287, %v789, 0
      %794 = vmatprep.subr.mxu0 0.0
      %795 = vmatpush1.xpose.msra.mxu0 %v792
      %796 = vmatprep.subr.mxu0 0.0
      %797 = vmatpush1.xpose.msra.mxu0 0.0
      %798 = vmatprep.subr.mxu0 0.0
      %799 = vmatpush1.xpose.msra.mxu0 0.0
      %800 = vmatprep.subr.mxu0 0.0
      %801 = vmatpush1.xpose.msra.mxu0 0.0
      %802 = vmatprep.subr.mxu0 0.0
      %803 = vmatpush1.xpose.msra.mxu0 0.0
      %804 = vmatprep.subr.mxu0 0.0
      %805 = vmatpush1.xpose.msra.mxu0 0.0
      %806 = vmatprep.subr.mxu0 0.0
      %807 = vmatpush1.xpose.msra.mxu0 0.0
      %808 = vmatprep.subr.mxu0 0.0
      %809 = vmatpush1.xpose.msra.mxu0 0.0
      %810 = vmatprep.subr.mxu0 0.0
      %811 = vmatpush1.xpose.msra.mxu0 0.0
      %812 = vmatprep.subr.mxu0 0.0
      %813 = vmatpush1.xpose.msra.mxu0 0.0
      %814 = vmatprep.subr.mxu0 0.0
      %815 = vmatpush1.xpose.msra.mxu0 0.0
      %816 = vmatprep.subr.mxu0 0.0
      %817 = vmatpush1.xpose.msra.mxu0 0.0
      %818 = vmatprep.subr.mxu0 0.0
      %819 = vmatpush1.xpose.msra.mxu0 0.0
      %820 = vmatprep.subr.mxu0 0.0
      %821 = vmatpush1.xpose.msra.mxu0 0.0
      %822 = vmatprep.subr.mxu0 0.0
      %823 = vmatpush1.xpose.msra.mxu0 0.0
      %824 = vmatprep.subr.mxu0 0.0
      %825 = vmatpush1.xpose.msra.mxu0 0.0
      %826 = vmatprep.subr.mxu0 0.0
      %827 = vmatpush1.xpose.msra.mxu0 0.0
      %828 = vmatprep.subr.mxu0 0.0
      %829 = vmatpush1.xpose.msra.mxu0 0.0
      %830 = vmatprep.subr.mxu0 0.0
      %831 = vmatpush1.xpose.msra.mxu0 0.0
      %832 = vmatprep.subr.mxu0 0.0
      %833 = vmatpush1.xpose.msra.mxu0 0.0
      %834 = vmatprep.subr.mxu0 0.0
      %835 = vmatpush1.xpose.msra.mxu0 0.0
      %836 = vmatprep.subr.mxu0 0.0
      %837 = vmatpush1.xpose.msra.mxu0 0.0
      %838 = vmatprep.subr.mxu0 0.0
      %839 = vmatpush1.xpose.msra.mxu0 0.0
      %840 = vmatprep.subr.mxu0 0.0
      %841 = vmatpush1.xpose.msra.mxu0 0.0
      %842 = vmatprep.subr.mxu0 0.0
      %843 = vmatpush1.xpose.msra.mxu0 0.0
      %844 = vmatprep.subr.mxu0 0.0
      %845 = vmatpush1.xpose.msra.mxu0 0.0
      %846 = vmatprep.subr.mxu0 0.0
      %847 = vmatpush1.xpose.msra.mxu0 0.0
      %848 = vmatprep.subr.mxu0 0.0
      %849 = vmatpush1.xpose.msra.mxu0 0.0
      %850 = vmatprep.subr.mxu0 0.0
      %851 = vmatpush1.xpose.msra.mxu0 0.0
      %852 = vmatprep.subr.mxu0 0.0
      %853 = vmatpush1.xpose.msra.mxu0 0.0
      %854 = vmatprep.subr.mxu0 0.0
      %855 = vmatpush1.xpose.msra.mxu0 0.0
      %856 = vmatprep.subr.mxu0 0.0
      %857 = vmatpush1.xpose.msra.mxu0 0.0
      %858 = vmatprep.mubr.f32.mxu0 0.0
      %859 = vmatmul.mubr.f32.gmra.mrb[0].mxu0 %v790
      %v860 = vpop.f32.mrb[0].mxu0
      %v861 = vadd.f32 0.0, %v860
      %v862 = vpop.f32.mrb[0].mxu0
      %863 = vdwg.mxu0
      %v864 = vmul.f32 %v861, 0.17677669
      %v865 = vsel %vm271, %v864, -inf
      %v866 = vsel %vm366, %v865, -inf
      %867 = vmax.xlane.f32.xlu0 %v866
      %v868 = vpop.xlane.xlu0 %867
      %v869 = vsub.f32 %v865, %v868
      %v870 = vmul.f32 %v869, 1.442695
      %v871 = vpow.pop %v870
      %v872 = vsel %vm366, %v871, 0.0
      %873 = vadd.xlane.f32.xlu0 %v872
      %v874 = vpop.xlane.xlu0 %873
      %v875 = vrcp.pop %v874
      %v876 = vmul.f32 %v871, %v875
      %877 = vrot.lane.b32.xlu0 %v286, 32
      %v878 = vpop.permute.xlu0 %877
      %v881 = vsel %vm366, %v876, 0
      %883 = vmatprep.subr.mxu0 0.0
      %884 = vmatpush1.msra.mxu0 %v878
      %885 = vmatprep.subr.mxu0 0.0
      %886 = vmatpush1.msra.mxu0 0.0
      %887 = vmatprep.subr.mxu0 0.0
      %888 = vmatpush1.msra.mxu0 0.0
      %889 = vmatprep.subr.mxu0 0.0
      %890 = vmatpush1.msra.mxu0 0.0
      %891 = vmatprep.subr.mxu0 0.0
      %892 = vmatpush1.msra.mxu0 0.0
      %893 = vmatprep.subr.mxu0 0.0
      %894 = vmatpush1.msra.mxu0 0.0
      %895 = vmatprep.subr.mxu0 0.0
      %896 = vmatpush1.msra.mxu0 0.0
      %897 = vmatprep.subr.mxu0 0.0
      %898 = vmatpush1.msra.mxu0 0.0
      %899 = vmatprep.subr.mxu0 0.0
      %900 = vmatpush1.msra.mxu0 0.0
      %901 = vmatprep.subr.mxu0 0.0
      %902 = vmatpush1.msra.mxu0 0.0
      %903 = vmatprep.subr.mxu0 0.0
      %904 = vmatpush1.msra.mxu0 0.0
      %905 = vmatprep.subr.mxu0 0.0
      %906 = vmatpush1.msra.mxu0 0.0
      %907 = vmatprep.subr.mxu0 0.0
      %908 = vmatpush1.msra.mxu0 0.0
      %909 = vmatprep.subr.mxu0 0.0
      %910 = vmatpush1.msra.mxu0 0.0
      %911 = vmatprep.subr.mxu0 0.0
      %912 = vmatpush1.msra.mxu0 0.0
      %913 = vmatprep.subr.mxu0 0.0
      %914 = vmatpush1.msra.mxu0 0.0
      %915 = vmatprep.subr.mxu0 0.0
      %916 = vmatpush1.msra.mxu0 0.0
      %917 = vmatprep.subr.mxu0 0.0
      %918 = vmatpush1.msra.mxu0 0.0
      %919 = vmatprep.subr.mxu0 0.0
      %920 = vmatpush1.msra.mxu0 0.0
      %921 = vmatprep.subr.mxu0 0.0
      %922 = vmatpush1.msra.mxu0 0.0
      %923 = vmatprep.subr.mxu0 0.0
      %924 = vmatpush1.msra.mxu0 0.0
      %925 = vmatprep.subr.mxu0 0.0
      %926 = vmatpush1.msra.mxu0 0.0
      %927 = vmatprep.subr.mxu0 0.0
      %928 = vmatpush1.msra.mxu0 0.0
      %929 = vmatprep.subr.mxu0 0.0
      %930 = vmatpush1.msra.mxu0 0.0
      %931 = vmatprep.subr.mxu0 0.0
      %932 = vmatpush1.msra.mxu0 0.0
      %933 = vmatprep.subr.mxu0 0.0
      %934 = vmatpush1.msra.mxu0 0.0
      %935 = vmatprep.subr.mxu0 0.0
      %936 = vmatpush1.msra.mxu0 0.0
      %937 = vmatprep.subr.mxu0 0.0
      %938 = vmatpush1.msra.mxu0 0.0
      %939 = vmatprep.subr.mxu0 0.0
      %940 = vmatpush1.msra.mxu0 0.0
      %941 = vmatprep.subr.mxu0 0.0
      %942 = vmatpush1.msra.mxu0 0.0
      %943 = vmatprep.subr.mxu0 0.0
      %944 = vmatpush1.msra.mxu0 0.0
      %945 = vmatprep.subr.mxu0 0.0
      %946 = vmatpush1.msra.mxu0 0.0
      %947 = vmatprep.mubr.f32.mxu0 0.0
      %948 = vmatmul.mubr.f32.gmra.mrb[0].mxu0 %v881
      %v949 = vpop.f32.mrb[0].mxu0
      %v950 = vadd.f32 0.0, %v949
      %v951 = vpop.f32.mrb[0].mxu0
      %952 = vdwg.mxu0
      %954 = vrot.lane.b32.xlu0 %v616, 32
      %v955 = vpop.permute.xlu0 %954
      %958 = vrot.lane.b32.xlu0 %v783, 64
      %v959 = vpop.permute.xlu0 %958
      %962 = vrot.lane.b32.xlu0 %v950, 96
      %v963 = vpop.permute.xlu0 %962
      %v965 = vsel %vm287, %v448, %v955
      %vm966 = vcmask 523264
      %v967 = vsel %vm966, %v965, %v959
      %vm968 = vcmask 785408
      %v969 = vsel %vm968, %v967, %v963
      %s970 = scalar_lea.vmem [#allocation3], %s278
      %971 = vst [vmem:[%s970] sm:$0xff] %v969
    $region34: #{tpu_custom_call.1} parent=1 // loop_footer
      %s277 = sadd.s32 1, %s273
    $region35: #{tpu_custom_call.1} parent=1 // loop_footer_branch
      %272 = sbr.rel target = $region31
    $region36: #{tpu_custom_call.1} parent=1 // loop_exit
      _
    %v972 = vld [vmem:[#allocation3] sm:$0xff]
    %v973 = vld [vmem:[#allocation3 + $0x8] sm:$0xff]
    %v974 = vld [vmem:[#allocation9] sm:$0xff]
    %v975 = vld [vmem:[#allocation9 + $0x8] sm:$0xff]
    %v976 = vld [vmem:[#allocation9 + $0x10] sm:$0xff]
    %v977 = vld [vmem:[#allocation9 + $0x18] sm:$0xff]
    %v978 = vld [vmem:[#allocation9 + $0x20] sm:$0xff]
    %v979 = vld [vmem:[#allocation9 + $0x28] sm:$0xff]
    %v980 = vld [vmem:[#allocation9 + $0x30] sm:$0xff]
    %v981 = vld [vmem:[#allocation9 + $0x38] sm:$0xff]
    %v982 = vld [vmem:[#allocation9 + $0x40] sm:$0xff]
    %v983 = vld [vmem:[#allocation9 + $0x48] sm:$0xff]
    %v984 = vld [vmem:[#allocation9 + $0x50] sm:$0xff]
    %v985 = vld [vmem:[#allocation9 + $0x58] sm:$0xff]
    %v986 = vld [vmem:[#allocation9 + $0x60] sm:$0xff]
    %v987 = vld [vmem:[#allocation9 + $0x68] sm:$0xff]
    %v988 = vld [vmem:[#allocation9 + $0x70] sm:$0xff]
    %v989 = vld [vmem:[#allocation9 + $0x78] sm:$0xff]
    %v990 = vld [vmem:[%s3] sm:$0x1]
    %v992 = vlaneseq
    %v993 = vshrl.u32 %v992, 7
    %v994 = vsub.s32 0, %v993
    %v995 = vrot.slane %v990, %v994
    %997 = vmatprep.subr.mxu0 0.0
    %998 = vmatpush1.msra.mxu0 %v974
    %999 = vmatprep.subr.mxu0 0.0
    %1000 = vmatpush1.msra.mxu0 %v975
    %1001 = vmatprep.subr.mxu0 0.0
    %1002 = vmatpush1.msra.mxu0 %v976
    %1003 = vmatprep.subr.mxu0 0.0
    %1004 = vmatpush1.msra.mxu0 %v977
    %1005 = vmatprep.subr.mxu0 0.0
    %1006 = vmatpush1.msra.mxu0 %v978
    %1007 = vmatprep.subr.mxu0 0.0
    %1008 = vmatpush1.msra.mxu0 %v979
    %1009 = vmatprep.subr.mxu0 0.0
    %1010 = vmatpush1.msra.mxu0 %v980
    %1011 = vmatprep.subr.mxu0 0.0
    %1012 = vmatpush1.msra.mxu0 %v981
    %1013 = vmatprep.subr.mxu0 0.0
    %1014 = vmatpush1.msra.mxu0 %v982
    %1015 = vmatprep.subr.mxu0 0.0
    %1016 = vmatpush1.msra.mxu0 %v983
    %1017 = vmatprep.subr.mxu0 0.0
    %1018 = vmatpush1.msra.mxu0 %v984
    %1019 = vmatprep.subr.mxu0 0.0
    %1020 = vmatpush1.msra.mxu0 %v985
    %1021 = vmatprep.subr.mxu0 0.0
    %1022 = vmatpush1.msra.mxu0 %v986
    %1023 = vmatprep.subr.mxu0 0.0
    %1024 = vmatpush1.msra.mxu0 %v987
    %1025 = vmatprep.subr.mxu0 0.0
    %1026 = vmatpush1.msra.mxu0 %v988
    %1027 = vmatprep.subr.mxu0 0.0
    %1028 = vmatpush1.msra.mxu0 %v989
    %1029 = vmatprep.subr.mxu0 0.0
    %1030 = vmatpush1.msra.mxu0 0.0
    %1031 = vmatprep.subr.mxu0 0.0
    %1032 = vmatpush1.msra.mxu0 0.0
    %1033 = vmatprep.subr.mxu0 0.0
    %1034 = vmatpush1.msra.mxu0 0.0
    %1035 = vmatprep.subr.mxu0 0.0
    %1036 = vmatpush1.msra.mxu0 0.0
    %1037 = vmatprep.subr.mxu0 0.0
    %1038 = vmatpush1.msra.mxu0 0.0
    %1039 = vmatprep.subr.mxu0 0.0
    %1040 = vmatpush1.msra.mxu0 0.0
    %1041 = vmatprep.subr.mxu0 0.0
    %1042 = vmatpush1.msra.mxu0 0.0
    %1043 = vmatprep.subr.mxu0 0.0
    %1044 = vmatpush1.msra.mxu0 0.0
    %1045 = vmatprep.subr.mxu0 0.0
    %1046 = vmatpush1.msra.mxu0 0.0
    %1047 = vmatprep.subr.mxu0 0.0
    %1048 = vmatpush1.msra.mxu0 0.0
    %1049 = vmatprep.subr.mxu0 0.0
    %1050 = vmatpush1.msra.mxu0 0.0
    %1051 = vmatprep.subr.mxu0 0.0
    %1052 = vmatpush1.msra.mxu0 0.0
    %1053 = vmatprep.subr.mxu0 0.0
    %1054 = vmatpush1.msra.mxu0 0.0
    %1055 = vmatprep.subr.mxu0 0.0
    %1056 = vmatpush1.msra.mxu0 0.0
    %1057 = vmatprep.subr.mxu0 0.0
    %1058 = vmatpush1.msra.mxu0 0.0
    %1059 = vmatprep.subr.mxu0 0.0
    %1060 = vmatpush1.msra.mxu0 0.0
    %1061 = vmatprep.mubr.f32.mxu0 0.0
    %1062 = vmatmul.mubr.f32.gmra.mrb[0].mxu0 %v972
    %v1063 = vpop.f32.mrb[0].mxu0
    %v1064 = vadd.f32 %v995, %v1063
    %v1065 = vpop.f32.mrb[0].mxu0
    %1066 = vmatprep.mubr.f32.mxu0 0.0
    %1067 = vmatmul.mubr.f32.gmra.mrb[0].mxu0 %v973
    %v1068 = vpop.f32.mrb[0].mxu0
    %v1069 = vadd.f32 %v995, %v1068
    %v1070 = vpop.f32.mrb[0].mxu0
    %1071 = vdwg.mxu0
    %1072 = vst [vmem:[#allocation10] sm:$0xff] %v1064
    %1073 = vst [vmem:[#allocation10 + $0x8] sm:$0xff] %v1069
    // Predicated region
    $region37: #{tpu_custom_call.1} parent=1 // pred_check
      _
    $region38: #{tpu_custom_call.1} parent=1 // pred_check_branch
      %1075 = sbr.rel (0) target = $region40
    $region39: #{tpu_custom_call.1} parent=1 // pred_region
      %s1077 = ssub.s32 256, 256
      %1078 = vsyncadd [#allocation6], %s1077
      %s1079 = sshll.u32 [#allocation10], 4
      %s1080 = int_to_ptr.vmem [resolvable:$true] %s1079
      %1085 = dma.vmem_to_hbm [thread:$0]  %s1080, 256, %s4, [#allocation6], 128, 128, 8
    $region40: #{tpu_custom_call.1} parent=1 // pred_fallthru
      _
    // Predicated region
    $region41: #{tpu_custom_call.1} parent=1 // pred_check
      _
    $region42: #{tpu_custom_call.1} parent=1 // pred_check_branch
      %1087 = sbr.rel (0) target = $region44
    $region43: #{tpu_custom_call.1} parent=1 // pred_region
      %1088 = dma.done [#allocation6], 256
    $region44: #{tpu_custom_call.1} parent=1 // pred_fallthru
      _
    %1089 = vsyncpa [#allocation5], 1
    %1090 = vsyncpa [#allocation8], 1
    %1091 = vsyncpa [#allocation6], 1

</llo_original>
